<compile_context>
chip_gen: v6e
topology: v6e:2x2x1
jax: 0.10.0
libtpu: 0.0.40
codegen_flags: <defaults>
</compile_context>

<pallas_src>
import functools

import jax
import jax.numpy as jnp
import numpy as np
from jax import lax
from jax.experimental import pallas as pl
from jax.experimental.pallas import tpu as pltpu


def _rup(x, m):
    return ((x + m - 1) // m) * m


# ----------------------------------------------------------------------------
# Kernel: one (batch, row-tile) step
# ----------------------------------------------------------------------------
def _decode_kernel(xm_ref, xh_ref, w_ref, b_ref, o_ref, *, THi, W, Cin, Cout):
    # xm_ref : (1, THi, W+1, Cin)  padded-image rows [r*THi, (r+1)*THi)
    # xh_ref : (1, 1,   W+1, Cin)  halo row (r+1)*THi
    # w_ref  : (4, Cin, 4*Cout)    per-tap, phase-stacked weights
    # b_ref  : (1, 4*Cout)         bias tiled across the 4 phases (f32)
    # o_ref  : (1, THi*W, 4*Cout)  phase-major tile, stored densely
    S = THi * W

    x_top = xm_ref[0]                                      # (THi, W+1, Cin)
    if THi > 1:
        x_bot = jnp.concatenate([xm_ref[0, 1:, :, :], xh_ref[0]], axis=0)
    else:
        x_bot = xh_ref[0]                                  # (THi, W+1, Cin)

    # Four stride-2 phase-decomposition taps of the transposed conv.
    # (THi, W, Cin) -> (S, Cin) is a pure view when W % 8 == 0.
    t00 = x_top[:, 0:W, :].reshape(S, Cin)          # x[ih,   iw  ]
    t01 = x_top[:, 1:W + 1, :].reshape(S, Cin)      # x[ih,   iw+1]
    t10 = x_bot[:, 0:W, :].reshape(S, Cin)          # x[ih+1, iw  ]
    t11 = x_bot[:, 1:W + 1, :].reshape(S, Cin)      # x[ih+1, iw+1]

    # 4 small MXU matmuls (K = Cin each), summed in f32; MXU has slack at
    # decoder channel counts so this beats masked im2col staging stores.
    acc = jnp.dot(t00, w_ref[0], preferred_element_type=jnp.float32)
    acc = acc + jnp.dot(t01, w_ref[1], preferred_element_type=jnp.float32)
    acc = acc + jnp.dot(t10, w_ref[2], preferred_element_type=jnp.float32)
    acc = acc + jnp.dot(t11, w_ref[3], preferred_element_type=jnp.float32)

    # fused bias + ReLU epilogue (f32), dense store of the phase-major tile
    o_ref[0] = jnp.maximum(acc + b_ref[...], 0.0).astype(o_ref.dtype)


# ----------------------------------------------------------------------------
# Wrapper helpers
# ----------------------------------------------------------------------------
def _phase_weight(w_pt):
    """(Cin, Cout, 3, 3) ConvTranspose2d weight -> (4, Cin, 4*Cout).

    Tap g in {0:(dh=0,dw=0), 1:(0,1), 2:(1,0), 3:(1,1)}; output phase
    p = (oh % 2) * 2 + (ow % 2); columns ordered p*Cout + cout.
    Derived from oh = 2*ih - 1 + kh (stride 2, pad 1, K=3, output_pad 1).
    """
    Cin, Cout = w_pt.shape[0], w_pt.shape[1]
    Wall = jnp.zeros((4, Cin, 4, Cout), w_pt.dtype)
    Wall = Wall.at[0, :, 0, :].set(w_pt[:, :, 1, 1])   # even / even
    Wall = Wall.at[0, :, 1, :].set(w_pt[:, :, 1, 2])   # even / odd
    Wall = Wall.at[1, :, 1, :].set(w_pt[:, :, 1, 0])
    Wall = Wall.at[0, :, 2, :].set(w_pt[:, :, 2, 1])   # odd  / even
    Wall = Wall.at[2, :, 2, :].set(w_pt[:, :, 0, 1])
    Wall = Wall.at[0, :, 3, :].set(w_pt[:, :, 2, 2])   # odd  / odd
    Wall = Wall.at[1, :, 3, :].set(w_pt[:, :, 2, 0])
    Wall = Wall.at[2, :, 3, :].set(w_pt[:, :, 0, 2])
    Wall = Wall.at[3, :, 3, :].set(w_pt[:, :, 0, 0])
    return Wall.reshape(4, Cin, 4 * Cout)


def _pick_row_tile(H, W, Cin, Cout, in_bytes, out_bytes, budget=6 * 2**20):
    """Rows per tile: any divisor of H, budget-capped, prefer >= 2 tiles."""
    per_row = (_rup(W + 1, 8) * _rup(Cin, 128) * in_bytes
               + W * _rup(4 * Cout, 128) * out_bytes)
    t_cap = max(1, budget // per_row)
    divs = [t for t in range(1, H + 1) if H % t == 0 and t <= t_cap] or [1]
    two = [t for t in divs if H // t >= 2]
    return max(two) if two else max(divs)


def _vmem_estimate(THi, W, Cin, Cout, in_bytes, out_bytes):
    """Double-buffered VMEM footprint of all pipeline blocks (padded)."""
    S = THi * W
    blk_in = THi * _rup(W + 1, 8) * _rup(Cin, 128) * in_bytes
    blk_halo = _rup(W + 1, 8) * _rup(Cin, 128) * in_bytes
    blk_w = 4 * _rup(Cin, 8) * _rup(4 * Cout, 128) * in_bytes
    blk_b = 8 * _rup(4 * Cout, 128) * 4
    blk_out = _rup(S, 8) * _rup(4 * Cout, 128) * out_bytes
    return 2 * (blk_in + blk_halo + blk_w + blk_b + blk_out)


# ----------------------------------------------------------------------------
# Forward
# ----------------------------------------------------------------------------
def decode_layer_forward(x_nchw, w_pt, bias, *, pool_size=2, kernel_size=3,
                         compute_dtype=jnp.float32, out_dtype=jnp.float32):
    """DecodeLayer forward (trans_conv + bias + ReLU path). x_nchw: (N,Cin,H,W)."""
    assert pool_size == 2 and kernel_size == 3, (
        "phase-decomposed kernel is specialized to kernel_size=3, pool_size=2")
    N, Cin, H, W = x_nchw.shape
    Cout = w_pt.shape[1]
    Ho, Wo = 2 * H, 2 * W

    in_bytes = jnp.dtype(compute_dtype).itemsize
    out_bytes = jnp.dtype(out_dtype).itemsize
    THi = _pick_row_tile(H, W, Cin, Cout, in_bytes, out_bytes)
    R = H // THi
    S = THi * W

    # Input-side glue (small tensor, one fused XLA pass): NCHW -> NHWC, cast
    # once to the MXU operand dtype, and add one zero row/col halo so the +1
    # taps read zeros at the boundary.
    x_nhwc = jnp.transpose(x_nchw, (0, 2, 3, 1)).astype(compute_dtype)
    xp = jnp.pad(x_nhwc, ((0, 0), (0, 1), (0, 1), (0, 0)))

    w4 = _phase_weight(w_pt.astype(jnp.float32)).astype(compute_dtype)
    b4 = jnp.tile(bias.astype(jnp.float32), 4).reshape(1, 4 * Cout)

    est = _vmem_estimate(THi, W, Cin, Cout, in_bytes, out_bytes)
    vmem_limit = int(min(48 * 2**20, max(32 * 2**20, 2 * est)))  # v7x-safe

    kernel = functools.partial(_decode_kernel, THi=THi, W=W, Cin=Cin, Cout=Cout)

    out_pm = pl.pallas_call(
        kernel,
        out_shape=jax.ShapeDtypeStruct((N, H * W, 4 * Cout), out_dtype),
        grid=(N, R),
        in_specs=[
            # main row-tile block
            pl.BlockSpec((1, THi, W + 1, Cin), lambda n, r: (n, r, 0, 0)),
            # one-row bottom halo (same array, 1-row block => block idx = row)
            pl.BlockSpec((1, 1, W + 1, Cin),
                         lambda n, r: (n, (r + 1) * THi, 0, 0)),
            pl.BlockSpec((4, Cin, 4 * Cout), lambda n, r: (0, 0, 0)),
            pl.BlockSpec((1, 4 * Cout), lambda n, r: (0, 0)),
        ],
        out_specs=pl.BlockSpec((1, S, 4 * Cout), lambda n, r: (n, r, 0)),
        compiler_params=pltpu.CompilerParams(
            dimension_semantics=("parallel", "parallel"),
            vmem_limit_bytes=vmem_limit),
    )(xp, xp, w4, b4)

    # Phase-major -> NCHW: one XLA transpose over the output (review option b).
    o = out_pm.reshape(N, H, W, 2, 2, Cout)            # (n, ih, iw, ph, pw, c)
    out = jnp.transpose(o, (0, 5, 1, 3, 2, 4))         # (n, c, ih, ph, iw, pw)
    return out.reshape(N, Cout, Ho, Wo)


# ----------------------------------------------------------------------------
# Pure-JAX reference (ConvTranspose2d + bias + ReLU, NCHW)
# ----------------------------------------------------------------------------
def _reference(x_nchw, w_pt, bias, *, pool_size=2, kernel_size=3):
    K, s = kernel_size, pool_size
    p = (K - 1) // 2
    op = s - 1
    w_oihw = jnp.transpose(w_pt[:, :, ::-1, ::-1], (1, 0, 2, 3))
    y = lax.conv_general_dilated(
        x_nchw, w_oihw,
        window_strides=(1, 1),
        padding=[(K - 1 - p, K - 1 - p + op), (K - 1 - p, K - 1 - p + op)],
        lhs_dilation=(s, s),
        dimension_numbers=("NCHW", "OIHW", "NCHW"))
    y = y + bias[None, :, None, None]
    return jnp.maximum(y, 0.0)


if __name__ == "__main__":
    key = jax.random.PRNGKey(0)
    k_x, k_w, k_b = jax.random.split(key, 3)

    N, Cin, Cout, H, W = 2, 4, 8, 16, 16
    x = jax.random.normal(k_x, (N, Cin, H, W), dtype=jnp.float32)
    w = jax.random.normal(k_w, (Cin, Cout, 3, 3), dtype=jnp.float32) * 0.1
    b = jax.random.normal(k_b, (Cout,), dtype=jnp.float32) * 0.1

    ref = _reference(x, w, b)

    # f32 path (tight tolerance).
    out = jax.block_until_ready(decode_layer_forward(x, w, b))
    assert out.shape == (N, Cout, 2 * H, 2 * W), out.shape
    np.testing.assert_allclose(np.asarray(out), np.asarray(ref),
                               rtol=1e-5, atol=1e-5)

    # bf16 MXU operands + bf16 writeback (v5e/v6e/v7x recommendation),
    # f32 accumulate / bias / ReLU.
    out_bf16 = jax.block_until_ready(
        decode_layer_forward(x, w, b, compute_dtype=jnp.bfloat16,
                             out_dtype=jnp.bfloat16))
    np.testing.assert_allclose(np.asarray(out_bf16).astype(np.float32),
                               np.asarray(ref), rtol=5e-2, atol=5e-2)

    print("KERNEL_OK")
</pallas_src>

<mosaic_0001>
module attributes {stable_mosaic.version = 11 : i64} {
  func.func @_decode_kernel(%arg0: i32, %arg1: i32, %arg2: memref<1x8x17x4xf32, #tpu.memory_space<vmem>>, %arg3: memref<1x1x17x4xf32, #tpu.memory_space<vmem>>, %arg4: memref<4x4x32xf32, #tpu.memory_space<vmem>>, %arg5: memref<1x32xf32, #tpu.memory_space<vmem>>, %arg6: memref<1x128x32xf32, #tpu.memory_space<vmem>>) attributes {dimension_semantics = [#tpu.dimension_semantics<parallel>, #tpu.dimension_semantics<parallel>], iteration_bounds = array<i64: 2, 2>, scalar_prefetch = 0 : i64, scratch_operands = 0 : i64, tpu.core_type = #tpu.core_type<tc>, window_params = [{transform_indices = @transform_0, window_bounds = array<i64: 1, 8, 17, 4>}, {transform_indices = @transform_1, window_bounds = array<i64: 1, 1, 17, 4>}, {pipeline_mode = #tpu.pipeline_mode<synchronous>, transform_indices = @transform_2, window_bounds = array<i64: 4, 4, 32>}, {pipeline_mode = #tpu.pipeline_mode<synchronous>, transform_indices = @transform_3, window_bounds = array<i64: 1, 32>}, {transform_indices = @transform_4, window_bounds = array<i64: 1, 128, 32>}]} {
    %c0 = arith.constant 0 : index
    %c0_0 = arith.constant 0 : index
    %c0_1 = arith.constant 0 : index
    %c0_2 = arith.constant 0 : index
    %0 = vector.load %arg2[%c0, %c0_0, %c0_1, %c0_2] : memref<1x8x17x4xf32, #tpu.memory_space<vmem>>, vector<1x8x17x4xf32>
    %1 = vector.shape_cast %0 : vector<1x8x17x4xf32> to vector<8x17x4xf32>
    %c0_3 = arith.constant 0 : index
    %c1 = arith.constant 1 : index
    %c0_4 = arith.constant 0 : index
    %c0_5 = arith.constant 0 : index
    %2 = vector.load %arg2[%c0_3, %c1, %c0_4, %c0_5] : memref<1x8x17x4xf32, #tpu.memory_space<vmem>>, vector<1x7x17x4xf32>
    %3 = vector.shape_cast %2 : vector<1x7x17x4xf32> to vector<7x17x4xf32>
    %c0_6 = arith.constant 0 : index
    %c0_7 = arith.constant 0 : index
    %c0_8 = arith.constant 0 : index
    %c0_9 = arith.constant 0 : index
    %4 = vector.load %arg3[%c0_6, %c0_7, %c0_8, %c0_9] : memref<1x1x17x4xf32, #tpu.memory_space<vmem>>, vector<1x1x17x4xf32>
    %5 = vector.shape_cast %4 : vector<1x1x17x4xf32> to vector<1x17x4xf32>
    %6 = tpu.concatenate %3, %5 in 0 : vector<7x17x4xf32>, vector<1x17x4xf32> -> vector<8x17x4xf32>
    %7 = vector.extract_strided_slice %1 {offsets = [0, 0, 0], sizes = [8, 16, 4], strides = [1, 1, 1]} : vector<8x17x4xf32> to vector<8x16x4xf32>
    %8 = vector.shape_cast %7 : vector<8x16x4xf32> to vector<128x4xf32>
    %9 = vector.extract_strided_slice %1 {offsets = [0, 1, 0], sizes = [8, 16, 4], strides = [1, 1, 1]} : vector<8x17x4xf32> to vector<8x16x4xf32>
    %10 = vector.shape_cast %9 : vector<8x16x4xf32> to vector<128x4xf32>
    %11 = vector.extract_strided_slice %6 {offsets = [0, 0, 0], sizes = [8, 16, 4], strides = [1, 1, 1]} : vector<8x17x4xf32> to vector<8x16x4xf32>
    %12 = vector.shape_cast %11 : vector<8x16x4xf32> to vector<128x4xf32>
    %13 = vector.extract_strided_slice %6 {offsets = [0, 1, 0], sizes = [8, 16, 4], strides = [1, 1, 1]} : vector<8x17x4xf32> to vector<8x16x4xf32>
    %14 = vector.shape_cast %13 : vector<8x16x4xf32> to vector<128x4xf32>
    %c0_10 = arith.constant 0 : index
    %c0_11 = arith.constant 0 : index
    %c0_12 = arith.constant 0 : index
    %15 = vector.load %arg4[%c0_10, %c0_11, %c0_12] : memref<4x4x32xf32, #tpu.memory_space<vmem>>, vector<1x4x32xf32>
    %16 = vector.shape_cast %15 : vector<1x4x32xf32> to vector<4x32xf32>
    %cst = arith.constant dense<0.000000e+00> : vector<128x32xf32>
    %17 = tpu.matmul %8, %16, %cst {dimension_numbers = #tpu.dot_dimension_numbers<[1], [0], [0], [1], [0, 0, 1, 1], [], []>} : vector<128x4xf32>, vector<4x32xf32>, vector<128x32xf32> -> vector<128x32xf32>
    %c1_13 = arith.constant 1 : index
    %c0_14 = arith.constant 0 : index
    %c0_15 = arith.constant 0 : index
    %18 = vector.load %arg4[%c1_13, %c0_14, %c0_15] : memref<4x4x32xf32, #tpu.memory_space<vmem>>, vector<1x4x32xf32>
    %19 = vector.shape_cast %18 : vector<1x4x32xf32> to vector<4x32xf32>
    %cst_16 = arith.constant dense<0.000000e+00> : vector<128x32xf32>
    %20 = tpu.matmul %10, %19, %cst_16 {dimension_numbers = #tpu.dot_dimension_numbers<[1], [0], [0], [1], [0, 0, 1, 1], [], []>} : vector<128x4xf32>, vector<4x32xf32>, vector<128x32xf32> -> vector<128x32xf32>
    %21 = arith.addf %17, %20 : vector<128x32xf32>
    %c2 = arith.constant 2 : index
    %c0_17 = arith.constant 0 : index
    %c0_18 = arith.constant 0 : index
    %22 = vector.load %arg4[%c2, %c0_17, %c0_18] : memref<4x4x32xf32, #tpu.memory_space<vmem>>, vector<1x4x32xf32>
    %23 = vector.shape_cast %22 : vector<1x4x32xf32> to vector<4x32xf32>
    %cst_19 = arith.constant dense<0.000000e+00> : vector<128x32xf32>
    %24 = tpu.matmul %12, %23, %cst_19 {dimension_numbers = #tpu.dot_dimension_numbers<[1], [0], [0], [1], [0, 0, 1, 1], [], []>} : vector<128x4xf32>, vector<4x32xf32>, vector<128x32xf32> -> vector<128x32xf32>
    %25 = arith.addf %21, %24 : vector<128x32xf32>
    %c3 = arith.constant 3 : index
    %c0_20 = arith.constant 0 : index
    %c0_21 = arith.constant 0 : index
    %26 = vector.load %arg4[%c3, %c0_20, %c0_21] : memref<4x4x32xf32, #tpu.memory_space<vmem>>, vector<1x4x32xf32>
    %27 = vector.shape_cast %26 : vector<1x4x32xf32> to vector<4x32xf32>
    %cst_22 = arith.constant dense<0.000000e+00> : vector<128x32xf32>
    %28 = tpu.matmul %14, %27, %cst_22 {dimension_numbers = #tpu.dot_dimension_numbers<[1], [0], [0], [1], [0, 0, 1, 1], [], []>} : vector<128x4xf32>, vector<4x32xf32>, vector<128x32xf32> -> vector<128x32xf32>
    %29 = arith.addf %25, %28 : vector<128x32xf32>
    %c0_23 = arith.constant 0 : index
    %c0_24 = arith.constant 0 : index
    %30 = vector.load %arg5[%c0_23, %c0_24] : memref<1x32xf32, #tpu.memory_space<vmem>>, vector<1x32xf32>
    %31 = vector.broadcast %30 : vector<1x32xf32> to vector<128x32xf32>
    %32 = arith.addf %29, %31 : vector<128x32xf32>
    %cst_25 = arith.constant 0.000000e+00 : f32
    %33 = vector.broadcast %cst_25 : f32 to vector<128x32xf32>
    %34 = arith.maximumf %32, %33 : vector<128x32xf32>
    %c0_26 = arith.constant 0 : index
    %c0_27 = arith.constant 0 : index
    %c0_28 = arith.constant 0 : index
    %35 = vector.load %arg6[%c0_26, %c0_27, %c0_28] : memref<1x128x32xf32, #tpu.memory_space<vmem>>, vector<1x128x32xf32>
    %36 = vector.shape_cast %35 : vector<1x128x32xf32> to vector<128x32xf32>
    %37 = vector.shape_cast %34 : vector<128x32xf32> to vector<1x128x32xf32>
    tpu.vector_store %arg6[%c0_26, %c0_27, %c0_28], %37 {strides = array<i32>} : memref<1x128x32xf32, #tpu.memory_space<vmem>>, vector<1x128x32xf32>,
    return
  }
  func.func @transform_0(%arg0: i32, %arg1: i32) -> (i32, i32, i32, i32) {
    %c0_i32 = arith.constant 0 : i32
    %c0_i32_0 = arith.constant 0 : i32
    %c0_i32_1 = arith.constant 0 : i32
    return %arg0, %arg1, %c0_i32, %c0_i32_0 : i32, i32, i32, i32
  }
  func.func @transform_1(%arg0: i32, %arg1: i32) -> (i32, i32, i32, i32) {
    %c1_i32 = arith.constant 1 : i32
    %0 = arith.addi %arg1, %c1_i32 : i32
    %c8_i32 = arith.constant 8 : i32
    %1 = arith.muli %0, %c8_i32 : i32
    %c0_i32 = arith.constant 0 : i32
    %c0_i32_0 = arith.constant 0 : i32
    %c0_i32_1 = arith.constant 0 : i32
    return %arg0, %1, %c0_i32, %c0_i32_0 : i32, i32, i32, i32
  }
  func.func @transform_2(%arg0: i32, %arg1: i32) -> (i32, i32, i32) {
    %c0_i32 = arith.constant 0 : i32
    %c0_i32_0 = arith.constant 0 : i32
    %c0_i32_1 = arith.constant 0 : i32
    %c0_i32_2 = arith.constant 0 : i32
    return %c0_i32, %c0_i32_0, %c0_i32_1 : i32, i32, i32
  }
  func.func @transform_3(%arg0: i32, %arg1: i32) -> (i32, i32) {
    %c0_i32 = arith.constant 0 : i32
    %c0_i32_0 = arith.constant 0 : i32
    %c0_i32_1 = arith.constant 0 : i32
    return %c0_i32, %c0_i32_0 : i32, i32
  }
  func.func @transform_4(%arg0: i32, %arg1: i32) -> (i32, i32, i32) {
    %c0_i32 = arith.constant 0 : i32
    %c0_i32_0 = arith.constant 0 : i32
    return %arg0, %arg1, %c0_i32 : i32, i32, i32
  }
}

</mosaic_0001>

<llo_original>
// kernel: tpu_custom_call.1
$region0: #{tpu_custom_call.1}
  #allocation0 [shape = 'u32[]', space=smem, size = 0x4, offset = 0x4, fixed_abs, tag = 'smem constant byte address 0x4 - core index']
  #allocation1 [shape = 'u32[144,128]{1,0:T(1,128)}', space=vmem, size = 0x12000, scoped, tag = 'internal scratch']
  %s0 = inlined_call_operand.vmem [shape: f32[2,17,17,4], index: 0, kind: input, shape index: {}]
  %s1 = inlined_call_operand.vmem [shape: f32[2,17,17,4], index: 1, kind: input, shape index: {}]
  %s2 = inlined_call_operand.vmem [shape: f32[4,4,32], index: 2, kind: input, shape index: {}]
  %s3 = inlined_call_operand.vmem [shape: f32[1,32], index: 3, kind: input, shape index: {}]
  %s4 = inlined_call_operand.vmem [shape: f32[2,256,32], index: 4, kind: output, shape index: {}]
  %s5 = sld [smem:[#allocation0]]
  $region49: #{tpu_custom_call.1} parent=0
    _
  %s7 = ssub.s32 1, %s5
  %s8 = scalar_select 0, %s7, %s5
  loop: start=0, step=1, limit=6
  $region2: #{tpu_custom_call.1} parent=0 // loop_pre_header
    _
  $region3: #{tpu_custom_call.1} parent=0 // loop_header
    %s10 = sphi 0, %s14
    %p11 = scmp.ge.s32.totalorder %s10, 6
    %s17 = sphi 0, %s29
    %s18 = sphi 0, %s25
    %s19 = sphi 0, %s17
    %s20 = sphi 0, %s18
    %s21 = sphi 0, %s19
    %s22 = sphi 0, %s20
    %s34 = sphi 0, %s36
    %s37 = sphi 0, %s34
    %s38 = sphi 0, %s37
    %s54 = sphi 0, %s38
    %s66 = sphi 0, %s68
    %s69 = sphi 0, %s66
    %s70 = sphi 0, %s69
    %s86 = sphi 0, %s70
    %s90 = sphi 0, %s90
    %s92 = sphi 0, %s90
    %s93 = sphi 0, %s92
    %s107 = sphi 0, %s93
    %s111 = sphi 0, %s111
    %s113 = sphi 0, %s111
    %s114 = sphi 0, %s113
    %s128 = sphi 0, %s114
    %s136 = sphi 0, %s138
    %s139 = sphi 0, %s136
    %s140 = sphi 0, %s139
    %s156 = sphi 0, %s140
  $region4: #{tpu_custom_call.1} parent=0 // loop_header_branch
    %13 = sbr.rel (%p11) target = $region8
  $region5: #{tpu_custom_call.1} parent=0 // loop_body
    %s15 = ssub.s32 %s10, 1
    %s16 = ssub.s32 %s10, 2
    %s23 = sadd.s32 1, %s18
    %p24 = scmp.ge.s32.totalorder %s23, 2
    %s25 = scalar_select %p24, 0, %s23
    %s26 = sadd.s32 1, %s17
    %s27 = scalar_select %p24, %s26, %s17
    %p28 = scmp.ge.s32.totalorder %s27, 2
    %s29 = scalar_select %p28, 0, %s27
    %s30 = ssub.s32 %s17, %s29
    %s31 = ssub.s32 %s18, %s25
    %s32 = sor.u32 %s30, %s31
    %p33 = scmp.eq.s32.totalorder %s32, 0
    %s35 = sadd.s32 %s34, 1
    %s36 = scalar_select %p33, %s34, %s35
    %p39 = pneg %p33
    %p40 = scmp.eq.s32.totalorder %s10, 3
    %p41 = por %p39, %p40
    %p42 = scmp.ne.s32.totalorder %s34, %s37
    %p43 = scmp.eq.s32.totalorder %s10, 0
    %p44 = por %p42, %p43
    %p45 = scmp.ne.s32.totalorder %s34, %s37
    %p46 = scmp.eq.s32.totalorder %s15, 3
    %p47 = por %p45, %p46
    %p48 = scmp.ne.s32.totalorder %s37, %s38
    %p49 = scmp.eq.s32.totalorder %s15, 0
    %p50 = por %p48, %p49
    %p51 = scmp.ne.s32.totalorder %s37, %s38
    %p52 = scmp.eq.s32.totalorder %s16, 3
    %p53 = por %p51, %p52
    %p55 = scmp.ne.s32.totalorder %s38, %s54
    %p56 = scmp.eq.s32.totalorder %s16, 0
    %p57 = por %p55, %p56
    %s58 = sadd.s32 %s18, 1
    %s59 = smul.u32 %s58, 8
    %s60 = sadd.s32 %s25, 1
    %s61 = smul.u32 %s60, 8
    %s62 = ssub.s32 %s17, %s29
    %s63 = ssub.s32 %s59, %s61
    %s64 = sor.u32 %s62, %s63
    %p65 = scmp.eq.s32.totalorder %s64, 0
    %s67 = sadd.s32 %s66, 1
    %s68 = scalar_select %p65, %s66, %s67
    %p71 = pneg %p65
    %p72 = scmp.eq.s32.totalorder %s10, 3
    %p73 = por %p71, %p72
    %p74 = scmp.ne.s32.totalorder %s66, %s69
    %p75 = scmp.eq.s32.totalorder %s10, 0
    %p76 = por %p74, %p75
    %p77 = scmp.ne.s32.totalorder %s66, %s69
    %p78 = scmp.eq.s32.totalorder %s15, 3
    %p79 = por %p77, %p78
    %p80 = scmp.ne.s32.totalorder %s69, %s70
    %p81 = scmp.eq.s32.totalorder %s15, 0
    %p82 = por %p80, %p81
    %p83 = scmp.ne.s32.totalorder %s69, %s70
    %p84 = scmp.eq.s32.totalorder %s16, 3
    %p85 = por %p83, %p84
    %p87 = scmp.ne.s32.totalorder %s70, %s86
    %p88 = scmp.eq.s32.totalorder %s16, 0
    %p89 = por %p87, %p88
    %s91 = sadd.s32 %s90, 1
    %p94 = scmp.eq.s32.totalorder %s10, 3
    %p95 = scmp.ne.s32.totalorder %s90, %s92
    %p96 = scmp.eq.s32.totalorder %s10, 0
    %p97 = por %p95, %p96
    %p98 = scmp.ne.s32.totalorder %s90, %s92
    %p99 = scmp.eq.s32.totalorder %s15, 3
    %p100 = por %p98, %p99
    %p101 = scmp.ne.s32.totalorder %s92, %s93
    %p102 = scmp.eq.s32.totalorder %s15, 0
    %p103 = por %p101, %p102
    %p104 = scmp.ne.s32.totalorder %s92, %s93
    %p105 = scmp.eq.s32.totalorder %s16, 3
    %p106 = por %p104, %p105
    %p108 = scmp.ne.s32.totalorder %s93, %s107
    %p109 = scmp.eq.s32.totalorder %s16, 0
    %p110 = por %p108, %p109
    %s112 = sadd.s32 %s111, 1
    %p115 = scmp.eq.s32.totalorder %s10, 3
    %p116 = scmp.ne.s32.totalorder %s111, %s113
    %p117 = scmp.eq.s32.totalorder %s10, 0
    %p118 = por %p116, %p117
    %p119 = scmp.ne.s32.totalorder %s111, %s113
    %p120 = scmp.eq.s32.totalorder %s15, 3
    %p121 = por %p119, %p120
    %p122 = scmp.ne.s32.totalorder %s113, %s114
    %p123 = scmp.eq.s32.totalorder %s15, 0
    %p124 = por %p122, %p123
    %p125 = scmp.ne.s32.totalorder %s113, %s114
    %p126 = scmp.eq.s32.totalorder %s16, 3
    %p127 = por %p125, %p126
    %p129 = scmp.ne.s32.totalorder %s114, %s128
    %p130 = scmp.eq.s32.totalorder %s16, 0
    %p131 = por %p129, %p130
    %s132 = ssub.s32 %s17, %s29
    %s133 = ssub.s32 %s18, %s25
    %s134 = sor.u32 %s132, %s133
    %p135 = scmp.eq.s32.totalorder %s134, 0
    %s137 = sadd.s32 %s136, 1
    %s138 = scalar_select %p135, %s136, %s137
    %p141 = pneg %p135
    %p142 = scmp.eq.s32.totalorder %s10, 3
    %p143 = por %p141, %p142
    %p144 = scmp.ne.s32.totalorder %s136, %s139
    %p145 = scmp.eq.s32.totalorder %s10, 0
    %p146 = por %p144, %p145
    %p147 = scmp.ne.s32.totalorder %s136, %s139
    %p148 = scmp.eq.s32.totalorder %s15, 3
    %p149 = por %p147, %p148
    %p150 = scmp.ne.s32.totalorder %s139, %s140
    %p151 = scmp.eq.s32.totalorder %s15, 0
    %p152 = por %p150, %p151
    %p153 = scmp.ne.s32.totalorder %s139, %s140
    %p154 = scmp.eq.s32.totalorder %s16, 3
    %p155 = por %p153, %p154
    %p157 = scmp.ne.s32.totalorder %s140, %s156
    %p158 = scmp.eq.s32.totalorder %s16, 0
    %p159 = por %p157, %p158
    %p160 = scmp.le.s32.totalorder 1, %s10
    %p161 = scmp.lt.s32.totalorder %s10, 5
    %p162 = pnand %p160, %p161
    %p163 = pneg %p162
    // Predicated region
    $region9: #{tpu_custom_call.1} parent=5 // pred_check
      _
    $region10: #{tpu_custom_call.1} parent=5 // pred_check_branch
      %165 = sbr.rel (%p162) target = $region12
    $region11: #{tpu_custom_call.1} parent=5 // pred_region
      %s166 = ssub.s32 %s10, 1
      // Predicated region
      $region13: #{tpu_custom_call.1} parent=11 // pred_check
        %p167 = pneg %p103
      $region14: #{tpu_custom_call.1} parent=11 // pred_check_branch
        %169 = sbr.rel (%p167) target = $region16
      $region15: #{tpu_custom_call.1} parent=11 // pred_region
        _
      $region16: #{tpu_custom_call.1} parent=11 // pred_fallthru
        _
      // Predicated region
      $region17: #{tpu_custom_call.1} parent=11 // pred_check
        %p170 = pneg %p124
      $region18: #{tpu_custom_call.1} parent=11 // pred_check_branch
        %172 = sbr.rel (%p170) target = $region20
      $region19: #{tpu_custom_call.1} parent=11 // pred_region
        _
      $region20: #{tpu_custom_call.1} parent=11 // pred_fallthru
        _
    $region12: #{tpu_custom_call.1} parent=5 // pred_fallthru
      _
    %p173 = scmp.lt.s32.totalorder %s10, 4
    // Predicated region
    $region21: #{tpu_custom_call.1} parent=5 // pred_check
      %p174 = pneg %p173
    $region22: #{tpu_custom_call.1} parent=5 // pred_check_branch
      %176 = sbr.rel (%p174) target = $region24
    $region23: #{tpu_custom_call.1} parent=5 // pred_region
      // Predicated region
      $region25: #{tpu_custom_call.1} parent=23 // pred_check
        %p177 = pneg %p44
      $region26: #{tpu_custom_call.1} parent=23 // pred_check_branch
        %179 = sbr.rel (%p177) target = $region28
      $region27: #{tpu_custom_call.1} parent=23 // pred_region
        %s180 = smul.u32 8, %s18
        %s181 = ssub.s32 17, %s180
        %p182 = scmp.lt.s32.totalorder %s181, 8
        %s183 = scalar_select %p182, %s181, 8
        %s184 = smul.u32 128, %s183
        %s185 = smul.u32 %s184, 3
        %p186 = scmp.lt.s32.totalorder %s17, 1
        %s187 = scalar_select %p186, %s17, 1
        %p188 = scmp.lt.s32.totalorder %s180, 16
        %s189 = scalar_select %p188, %s180, 16
        %s190 = smul.addr %s189, 3
        %s191 = smul.addr %s187, 51
        %s192 = sadd.s32 %s190, %s191
        %s193 = smul.addr %s192, 8
        %s194 = scalar_lea.vmem %s0, %s193
        %s195 = smul.u32 8, %s18
        %s196 = ssub.s32 17, %s195
        %p197 = scmp.lt.s32.totalorder %s196, 8
        %s198 = scalar_select %p197, %s196, 8
        %s199 = smul.u32 128, %s198
        %s200 = smul.u32 %s199, 3
      $region28: #{tpu_custom_call.1} parent=23 // pred_fallthru
        _
      // Predicated region
      $region29: #{tpu_custom_call.1} parent=23 // pred_check
        %p201 = pneg %p76
      $region30: #{tpu_custom_call.1} parent=23 // pred_check_branch
        %203 = sbr.rel (%p201) target = $region32
      $region31: #{tpu_custom_call.1} parent=23 // pred_region
        %s204 = sadd.s32 %s18, 1
        %s205 = smul.u32 %s204, 8
        %p206 = scmp.lt.s32.totalorder %s17, 1
        %s207 = scalar_select %p206, %s17, 1
        %p208 = scmp.lt.s32.totalorder %s205, 16
        %s209 = scalar_select %p208, %s205, 16
        %s210 = smul.addr %s209, 3
        %s211 = smul.addr %s207, 51
        %s212 = sadd.s32 %s210, %s211
        %s213 = smul.addr %s212, 8
        %s214 = scalar_lea.vmem %s1, %s213
        %s215 = sadd.s32 %s18, 1
        %s216 = smul.u32 %s215, 8
      $region32: #{tpu_custom_call.1} parent=23 // pred_fallthru
        _
    $region24: #{tpu_custom_call.1} parent=5 // pred_fallthru
      _
    %p217 = scmp.le.s32.totalorder 1, %s10
    %p218 = scmp.lt.s32.totalorder %s10, 5
    %p219 = pnand %p217, %p218
    %p220 = pneg %p219
    // Predicated region
    $region33: #{tpu_custom_call.1} parent=5 // pred_check
      _
    $region34: #{tpu_custom_call.1} parent=5 // pred_check_branch
      %222 = sbr.rel (%p219) target = $region36
    $region35: #{tpu_custom_call.1} parent=5 // pred_region
      %s223 = ssub.s32 %s10, 1
      %s224 = smul.u32 8, %s20
      %s225 = ssub.s32 17, %s224
      %p226 = scmp.lt.s32.totalorder %s225, 8
      %s227 = scalar_select %p226, %s225, 8
      %s228 = smul.u32 128, %s227
      %s229 = smul.u32 %s228, 3
      %p230 = scmp.lt.s32.totalorder %s19, 1
      %s231 = scalar_select %p230, %s19, 1
      %p232 = scmp.lt.s32.totalorder %s224, 16
      %s233 = scalar_select %p232, %s224, 16
      %s234 = smul.addr %s233, 3
      %s235 = smul.addr %s231, 51
      %s236 = sadd.s32 %s234, %s235
      %s237 = smul.addr %s236, 8
      %s238 = scalar_lea.vmem %s0, %s237
      %p239 = pneg %p50
      %p240 = pneg %p47
      %s241 = sadd.s32 %s20, 1
      %s242 = smul.u32 %s241, 8
      %p243 = scmp.lt.s32.totalorder %s19, 1
      %s244 = scalar_select %p243, %s19, 1
      %p245 = scmp.lt.s32.totalorder %s242, 16
      %s246 = scalar_select %p245, %s242, 16
      %s247 = smul.addr %s246, 3
      %s248 = smul.addr %s244, 51
      %s249 = sadd.s32 %s247, %s248
      %s250 = smul.addr %s249, 8
      %s251 = scalar_lea.vmem %s1, %s250
      %p252 = pneg %p82
      %p253 = pneg %p79
      %p254 = pneg %p103
      %p255 = pneg %p100
      %p256 = pneg %p124
      %p257 = pneg %p121
      %p258 = pneg %p152
      %p259 = pneg %p149
      %s260 = smul.u32 16, %s20
      %p261 = scmp.lt.s32.totalorder %s19, 1
      %s262 = scalar_select %p261, %s19, 1
      %p263 = scmp.lt.s32.totalorder %s260, 31
      %s264 = scalar_select %p263, %s260, 31
      %s265 = smul.addr %s262, 32
      %s266 = sadd.s32 %s264, %s265
      %s267 = smul.addr %s266, 8
      %s268 = scalar_lea.vmem %s4, %s267
      %s269 = smul.u32 8, %s20
      %s270 = ssub.s32 17, %s269
      %p271 = scmp.lt.s32.totalorder %s270, 8
      %s272 = scalar_select %p271, %s270, 8
      %s273 = smul.u32 128, %s272
      %s274 = smul.u32 %s273, 3
      %p275 = scmp.lt.s32.totalorder %s19, 1
      %s276 = scalar_select %p275, %s19, 1
      %p277 = scmp.lt.s32.totalorder %s269, 16
      %s278 = scalar_select %p277, %s269, 16
      %s279 = smul.addr %s278, 3
      %s280 = smul.addr %s276, 51
      %s281 = sadd.s32 %s279, %s280
      %s282 = smul.addr %s281, 8
      %s283 = scalar_lea.vmem %s0, %s282
      %s284 = smul.u32 8, %s20
      %s285 = ssub.s32 17, %s284
      %p286 = scmp.lt.s32.totalorder %s285, 8
      %s287 = scalar_select %p286, %s285, 8
      %s288 = smul.u32 128, %s287
      %s289 = smul.u32 %s288, 3
      %s290 = sadd.s32 %s20, 1
      %s291 = smul.u32 %s290, 8
      %p292 = scmp.lt.s32.totalorder %s19, 1
      %s293 = scalar_select %p292, %s19, 1
      %p294 = scmp.lt.s32.totalorder %s291, 16
      %s295 = scalar_select %p294, %s291, 16
      %s296 = smul.addr %s295, 3
      %s297 = smul.addr %s293, 51
      %s298 = sadd.s32 %s296, %s297
      %s299 = smul.addr %s298, 8
      %s300 = scalar_lea.vmem %s1, %s299
      %s301 = sadd.s32 %s20, 1
      %s302 = smul.u32 %s301, 8
      %s303 = smul.u32 16, %s20
      %p304 = scmp.lt.s32.totalorder %s19, 1
      %s305 = scalar_select %p304, %s19, 1
      %p306 = scmp.lt.s32.totalorder %s303, 31
      %s307 = scalar_select %p306, %s303, 31
      %s308 = smul.addr %s305, 32
      %s309 = sadd.s32 %s307, %s308
      %s310 = smul.addr %s309, 8
      %s311 = scalar_lea.vmem %s4, %s310
      %s312 = smul.u32 16, %s20
      %v313 = vld [vmem:[%s283] sm:$0xff]
      %v314 = vld [vmem:[%s283 + $0x8] sm:$0xff]
      %v315 = vld [vmem:[%s283 + $0x10] sm:$0x1]
      %v316 = vld [vmem:[%s283 + $0x18] sm:$0xff]
      %v317 = vld [vmem:[%s283 + $0x20] sm:$0xff]
      %v318 = vld [vmem:[%s283 + $0x28] sm:$0x1]
      %v319 = vld [vmem:[%s283 + $0x30] sm:$0xff]
      %v320 = vld [vmem:[%s283 + $0x38] sm:$0xff]
      %v321 = vld [vmem:[%s283 + $0x40] sm:$0x1]
      %v322 = vld [vmem:[%s283 + $0x48] sm:$0xff]
      %v323 = vld [vmem:[%s283 + $0x50] sm:$0xff]
      %v324 = vld [vmem:[%s283 + $0x58] sm:$0x1]
      %v325 = vld [vmem:[%s283 + $0x60] sm:$0xff]
      %v326 = vld [vmem:[%s283 + $0x68] sm:$0xff]
      %v327 = vld [vmem:[%s283 + $0x70] sm:$0x1]
      %v328 = vld [vmem:[%s283 + $0x78] sm:$0xff]
      %v329 = vld [vmem:[%s283 + $0x80] sm:$0xff]
      %v330 = vld [vmem:[%s283 + $0x88] sm:$0x1]
      %v331 = vld [vmem:[%s283 + $0x90] sm:$0xff]
      %v332 = vld [vmem:[%s283 + $0x98] sm:$0xff]
      %v333 = vld [vmem:[%s283 + $0xa0] sm:$0x1]
      %v334 = vld [vmem:[%s283 + $0xa8] sm:$0xff]
      %v335 = vld [vmem:[%s283 + $0xb0] sm:$0xff]
      %v336 = vld [vmem:[%s283 + $0xb8] sm:$0x1]
      %s337 = scalar_lea.vmem %s283, 24
      %v338 = vld [vmem:[%s337] sm:$0xff]
      %v339 = vld [vmem:[%s337 + $0x8] sm:$0xff]
      %v340 = vld [vmem:[%s337 + $0x10] sm:$0x1]
      %v341 = vld [vmem:[%s337 + $0x18] sm:$0xff]
      %v342 = vld [vmem:[%s337 + $0x20] sm:$0xff]
      %v343 = vld [vmem:[%s337 + $0x28] sm:$0x1]
      %v344 = vld [vmem:[%s337 + $0x30] sm:$0xff]
      %v345 = vld [vmem:[%s337 + $0x38] sm:$0xff]
      %v346 = vld [vmem:[%s337 + $0x40] sm:$0x1]
      %v347 = vld [vmem:[%s337 + $0x48] sm:$0xff]
      %v348 = vld [vmem:[%s337 + $0x50] sm:$0xff]
      %v349 = vld [vmem:[%s337 + $0x58] sm:$0x1]
      %v350 = vld [vmem:[%s337 + $0x60] sm:$0xff]
      %v351 = vld [vmem:[%s337 + $0x68] sm:$0xff]
      %v352 = vld [vmem:[%s337 + $0x70] sm:$0x1]
      %v353 = vld [vmem:[%s337 + $0x78] sm:$0xff]
      %v354 = vld [vmem:[%s337 + $0x80] sm:$0xff]
      %v355 = vld [vmem:[%s337 + $0x88] sm:$0x1]
      %v356 = vld [vmem:[%s337 + $0x90] sm:$0xff]
      %v357 = vld [vmem:[%s337 + $0x98] sm:$0xff]
      %v358 = vld [vmem:[%s337 + $0xa0] sm:$0x1]
      %v359 = vld [vmem:[%s300] sm:$0xff]
      %v360 = vld [vmem:[%s300 + $0x8] sm:$0xff]
      %v361 = vld [vmem:[%s300 + $0x10] sm:$0x1]
      %vm386 = vcmask 1046528
      %v387 = vrot.slane %v313, 1
      %v388 = vrot.slane %v314, 1
      %v389 = vsel %vm386, %v387, %v388
      %v390 = vrot.slane %v315, 1
      %v391 = vsel %vm386, %v388, %v390
      %v392 = vrot.slane %v316, 1
      %v393 = vrot.slane %v317, 1
      %v394 = vsel %vm386, %v392, %v393
      %v395 = vrot.slane %v318, 1
      %v396 = vsel %vm386, %v393, %v395
      %v397 = vrot.slane %v319, 1
      %v398 = vrot.slane %v320, 1
      %v399 = vsel %vm386, %v397, %v398
      %v400 = vrot.slane %v321, 1
      %v401 = vsel %vm386, %v398, %v400
      %v402 = vrot.slane %v322, 1
      %v403 = vrot.slane %v323, 1
      %v404 = vsel %vm386, %v402, %v403
      %v405 = vrot.slane %v324, 1
      %v406 = vsel %vm386, %v403, %v405
      %v407 = vrot.slane %v325, 1
      %v408 = vrot.slane %v326, 1
      %v409 = vsel %vm386, %v407, %v408
      %v410 = vrot.slane %v327, 1
      %v411 = vsel %vm386, %v408, %v410
      %v412 = vrot.slane %v328, 1
      %v413 = vrot.slane %v329, 1
      %v414 = vsel %vm386, %v412, %v413
      %v415 = vrot.slane %v330, 1
      %v416 = vsel %vm386, %v413, %v415
      %v417 = vrot.slane %v331, 1
      %v418 = vrot.slane %v332, 1
      %v419 = vsel %vm386, %v417, %v418
      %v420 = vrot.slane %v333, 1
      %v421 = vsel %vm386, %v418, %v420
      %v422 = vrot.slane %v334, 1
      %v423 = vrot.slane %v335, 1
      %v424 = vsel %vm386, %v422, %v423
      %v425 = vrot.slane %v336, 1
      %v426 = vsel %vm386, %v423, %v425
      %v451 = vrot.slane %v338, 1
      %v452 = vrot.slane %v339, 1
      %v453 = vsel %vm386, %v451, %v452
      %v454 = vrot.slane %v340, 1
      %v455 = vsel %vm386, %v452, %v454
      %v456 = vrot.slane %v341, 1
      %v457 = vrot.slane %v342, 1
      %v458 = vsel %vm386, %v456, %v457
      %v459 = vrot.slane %v343, 1
      %v460 = vsel %vm386, %v457, %v459
      %v461 = vrot.slane %v344, 1
      %v462 = vrot.slane %v345, 1
      %v463 = vsel %vm386, %v461, %v462
      %v464 = vrot.slane %v346, 1
      %v465 = vsel %vm386, %v462, %v464
      %v466 = vrot.slane %v347, 1
      %v467 = vrot.slane %v348, 1
      %v468 = vsel %vm386, %v466, %v467
      %v469 = vrot.slane %v349, 1
      %v470 = vsel %vm386, %v467, %v469
      %v471 = vrot.slane %v350, 1
      %v472 = vrot.slane %v351, 1
      %v473 = vsel %vm386, %v471, %v472
      %v474 = vrot.slane %v352, 1
      %v475 = vsel %vm386, %v472, %v474
      %v476 = vrot.slane %v353, 1
      %v477 = vrot.slane %v354, 1
      %v478 = vsel %vm386, %v476, %v477
      %v479 = vrot.slane %v355, 1
      %v480 = vsel %vm386, %v477, %v479
      %v481 = vrot.slane %v356, 1
      %v482 = vrot.slane %v357, 1
      %v483 = vsel %vm386, %v481, %v482
      %v484 = vrot.slane %v358, 1
      %v485 = vsel %vm386, %v482, %v484
      %v486 = vrot.slane %v359, 1
      %v487 = vrot.slane %v360, 1
      %v488 = vsel %vm386, %v486, %v487
      %v489 = vrot.slane %v361, 1
      %v490 = vsel %vm386, %v487, %v489
      %v491 = vld [vmem:[%s2] sm:$0xf]
      %s492 = scalar_lea.vmem %s2, 4
      %v493 = vld [vmem:[%s492] sm:$0xf]
      %vm494 = vcmask 31744
      %v495 = vsel %vm494, %v389, 0
      %v497 = vsel %vm494, %v391, 0
      %v499 = vsel %vm494, %v394, 0
      %v501 = vsel %vm494, %v396, 0
      %v503 = vsel %vm494, %v399, 0
      %v505 = vsel %vm494, %v401, 0
      %v507 = vsel %vm494, %v404, 0
      %v509 = vsel %vm494, %v406, 0
      %v511 = vsel %vm494, %v409, 0
      %v513 = vsel %vm494, %v411, 0
      %v515 = vsel %vm494, %v414, 0
      %v517 = vsel %vm494, %v416, 0
      %v519 = vsel %vm494, %v419, 0
      %v521 = vsel %vm494, %v421, 0
      %v523 = vsel %vm494, %v424, 0
      %v525 = vsel %vm494, %v426, 0
      %vm527 = vcmask 1043456
      %v529 = vsel %vm527, %v493, 0
      %531 = vmatprep.subr.mxu0 0.0
      %532 = vmatpush1.msra.mxu0 0.0
      %533 = vmatprep.subr.mxu0 0.0
      %534 = vmatpush1.msra.mxu0 0.0
      %535 = vmatprep.subr.mxu0 0.0
      %536 = vmatpush1.msra.mxu0 0.0
      %537 = vmatprep.subr.mxu0 0.0
      %538 = vmatpush1.msra.mxu0 0.0
      %539 = vmatprep.subr.mxu0 0.0
      %540 = vmatpush1.msra.mxu0 0.0
      %541 = vmatprep.subr.mxu0 0.0
      %542 = vmatpush1.msra.mxu0 0.0
      %543 = vmatprep.subr.mxu0 0.0
      %544 = vmatpush1.msra.mxu0 0.0
      %545 = vmatprep.subr.mxu0 0.0
      %546 = vmatpush1.msra.mxu0 0.0
      %547 = vmatprep.subr.mxu0 0.0
      %548 = vmatpush1.msra.mxu0 0.0
      %549 = vmatprep.subr.mxu0 0.0
      %550 = vmatpush1.msra.mxu0 0.0
      %551 = vmatprep.subr.mxu0 0.0
      %552 = vmatpush1.msra.mxu0 0.0
      %553 = vmatprep.subr.mxu0 0.0
      %554 = vmatpush1.msra.mxu0 0.0
      %555 = vmatprep.subr.mxu0 0.0
      %556 = vmatpush1.msra.mxu0 0.0
      %557 = vmatprep.subr.mxu0 0.0
      %558 = vmatpush1.msra.mxu0 0.0
      %559 = vmatprep.subr.mxu0 0.0
      %560 = vmatpush1.msra.mxu0 0.0
      %561 = vmatprep.subr.mxu0 0.0
      %562 = vmatpush1.msra.mxu0 %v529
      %563 = vmatprep.subr.mxu0 0.0
      %564 = vmatpush2.msra.mxu0 0.0
      %565 = vmatprep.subr.mxu0 0.0
      %566 = vmatpush2.msra.mxu0 0.0
      %567 = vmatprep.subr.mxu0 0.0
      %568 = vmatpush2.msra.mxu0 0.0
      %569 = vmatprep.subr.mxu0 0.0
      %570 = vmatpush2.msra.mxu0 0.0
      %571 = vmatprep.subr.mxu0 0.0
      %572 = vmatpush2.msra.mxu0 0.0
      %573 = vmatprep.subr.mxu0 0.0
      %574 = vmatpush2.msra.mxu0 0.0
      %575 = vmatprep.subr.mxu0 0.0
      %576 = vmatpush2.msra.mxu0 0.0
      %577 = vmatprep.subr.mxu0 0.0
      %578 = vmatpush2.msra.mxu0 0.0
      %579 = vmatprep.subr.mxu0 0.0
      %580 = vmatpush2.msra.mxu0 0.0
      %581 = vmatprep.subr.mxu0 0.0
      %582 = vmatpush2.msra.mxu0 0.0
      %583 = vmatprep.subr.mxu0 0.0
      %584 = vmatpush2.msra.mxu0 0.0
      %585 = vmatprep.subr.mxu0 0.0
      %586 = vmatpush2.msra.mxu0 0.0
      %587 = vmatprep.subr.mxu0 0.0
      %588 = vmatpush2.msra.mxu0 0.0
      %589 = vmatprep.subr.mxu0 0.0
      %590 = vmatpush2.msra.mxu0 0.0
      %591 = vmatprep.subr.mxu0 0.0
      %592 = vmatpush2.msra.mxu0 0.0
      %593 = vmatprep.subr.mxu0 0.0
      %594 = vmatpush2.msra.mxu0 0.0
      %595 = vmatprep.mubr.f32.mxu0 0.0
      %596 = vmatmul.mubr.f32.gmra.mxu0 %v495
      %v597 = vpop.f32.mrf.mxu0
      %v598 = vadd.f32 0.0, %v597
      %v599 = vpop.f32.mrf.mxu0
      %600 = vmatprep.mubr.f32.mxu0 0.0
      %601 = vmatmul.mubr.f32.gmra.mxu0 %v497
      %v602 = vpop.f32.mrf.mxu0
      %v603 = vadd.f32 0.0, %v602
      %v604 = vpop.f32.mrf.mxu0
      %605 = vmatprep.mubr.f32.mxu0 0.0
      %606 = vmatmul.mubr.f32.gmra.mxu0 %v499
      %v607 = vpop.f32.mrf.mxu0
      %v608 = vadd.f32 0.0, %v607
      %v609 = vpop.f32.mrf.mxu0
      %610 = vmatprep.mubr.f32.mxu0 0.0
      %611 = vmatmul.mubr.f32.gmra.mxu0 %v501
      %v612 = vpop.f32.mrf.mxu0
      %v613 = vadd.f32 0.0, %v612
      %v614 = vpop.f32.mrf.mxu0
      %615 = vmatprep.mubr.f32.mxu0 0.0
      %616 = vmatmul.mubr.f32.gmra.mxu0 %v503
      %v617 = vpop.f32.mrf.mxu0
      %v618 = vadd.f32 0.0, %v617
      %v619 = vpop.f32.mrf.mxu0
      %620 = vmatprep.mubr.f32.mxu0 0.0
      %621 = vmatmul.mubr.f32.gmra.mxu0 %v505
      %v622 = vpop.f32.mrf.mxu0
      %v623 = vadd.f32 0.0, %v622
      %v624 = vpop.f32.mrf.mxu0
      %625 = vmatprep.mubr.f32.mxu0 0.0
      %626 = vmatmul.mubr.f32.gmra.mxu0 %v507
      %v627 = vpop.f32.mrf.mxu0
      %v628 = vadd.f32 0.0, %v627
      %v629 = vpop.f32.mrf.mxu0
      %630 = vmatprep.mubr.f32.mxu0 0.0
      %631 = vmatmul.mubr.f32.gmra.mxu0 %v509
      %v632 = vpop.f32.mrf.mxu0
      %v633 = vadd.f32 0.0, %v632
      %v634 = vpop.f32.mrf.mxu0
      %635 = vmatprep.mubr.f32.mxu0 0.0
      %636 = vmatmul.mubr.f32.gmra.mxu0 %v511
      %v637 = vpop.f32.mrf.mxu0
      %v638 = vadd.f32 0.0, %v637
      %v639 = vpop.f32.mrf.mxu0
      %640 = vmatprep.mubr.f32.mxu0 0.0
      %641 = vmatmul.mubr.f32.gmra.mxu0 %v513
      %v642 = vpop.f32.mrf.mxu0
      %v643 = vadd.f32 0.0, %v642
      %v644 = vpop.f32.mrf.mxu0
      %645 = vmatprep.mubr.f32.mxu0 0.0
      %646 = vmatmul.mubr.f32.gmra.mxu0 %v515
      %v647 = vpop.f32.mrf.mxu0
      %v648 = vadd.f32 0.0, %v647
      %v649 = vpop.f32.mrf.mxu0
      %650 = vmatprep.mubr.f32.mxu0 0.0
      %651 = vmatmul.mubr.f32.gmra.mxu0 %v517
      %v652 = vpop.f32.mrf.mxu0
      %v653 = vadd.f32 0.0, %v652
      %v654 = vpop.f32.mrf.mxu0
      %655 = vmatprep.mubr.f32.mxu0 0.0
      %656 = vmatmul.mubr.f32.gmra.mxu0 %v519
      %v657 = vpop.f32.mrf.mxu0
      %v658 = vadd.f32 0.0, %v657
      %v659 = vpop.f32.mrf.mxu0
      %660 = vmatprep.mubr.f32.mxu0 0.0
      %661 = vmatmul.mubr.f32.gmra.mxu0 %v521
      %v662 = vpop.f32.mrf.mxu0
      %v663 = vadd.f32 0.0, %v662
      %v664 = vpop.f32.mrf.mxu0
      %665 = vmatprep.mubr.f32.mxu0 0.0
      %666 = vmatmul.mubr.f32.gmra.mxu0 %v523
      %v667 = vpop.f32.mrf.mxu0
      %v668 = vadd.f32 0.0, %v667
      %v669 = vpop.f32.mrf.mxu0
      %670 = vmatprep.mubr.f32.mxu0 0.0
      %671 = vmatmul.mubr.f32.gmra.mxu0 %v525
      %v672 = vpop.f32.mrf.mxu0
      %v673 = vadd.f32 0.0, %v672
      %v674 = vpop.f32.mrf.mxu0
      %675 = vdwg.mxu0
      %v676 = vsel %vm494, %v313, 0
      %v678 = vsel %vm494, %v314, 0
      %v680 = vsel %vm494, %v316, 0
      %v682 = vsel %vm494, %v317, 0
      %v684 = vsel %vm494, %v319, 0
      %v686 = vsel %vm494, %v320, 0
      %v688 = vsel %vm494, %v322, 0
      %v690 = vsel %vm494, %v323, 0
      %v692 = vsel %vm494, %v325, 0
      %v694 = vsel %vm494, %v326, 0
      %v696 = vsel %vm494, %v328, 0
      %v698 = vsel %vm494, %v329, 0
      %v700 = vsel %vm494, %v331, 0
      %v702 = vsel %vm494, %v332, 0
      %v704 = vsel %vm494, %v334, 0
      %v706 = vsel %vm494, %v335, 0
      %v709 = vsel %vm527, %v491, 0
      %711 = vmatprep.subr.mxu0 0.0
      %712 = vmatpush1.msra.mxu0 0.0
      %713 = vmatprep.subr.mxu0 0.0
      %714 = vmatpush1.msra.mxu0 0.0
      %715 = vmatprep.subr.mxu0 0.0
      %716 = vmatpush1.msra.mxu0 0.0
      %717 = vmatprep.subr.mxu0 0.0
      %718 = vmatpush1.msra.mxu0 0.0
      %719 = vmatprep.subr.mxu0 0.0
      %720 = vmatpush1.msra.mxu0 0.0
      %721 = vmatprep.subr.mxu0 0.0
      %722 = vmatpush1.msra.mxu0 0.0
      %723 = vmatprep.subr.mxu0 0.0
      %724 = vmatpush1.msra.mxu0 0.0
      %725 = vmatprep.subr.mxu0 0.0
      %726 = vmatpush1.msra.mxu0 0.0
      %727 = vmatprep.subr.mxu0 0.0
      %728 = vmatpush1.msra.mxu0 0.0
      %729 = vmatprep.subr.mxu0 0.0
      %730 = vmatpush1.msra.mxu0 0.0
      %731 = vmatprep.subr.mxu0 0.0
      %732 = vmatpush1.msra.mxu0 0.0
      %733 = vmatprep.subr.mxu0 0.0
      %734 = vmatpush1.msra.mxu0 0.0
      %735 = vmatprep.subr.mxu0 0.0
      %736 = vmatpush1.msra.mxu0 0.0
      %737 = vmatprep.subr.mxu0 0.0
      %738 = vmatpush1.msra.mxu0 0.0
      %739 = vmatprep.subr.mxu0 0.0
      %740 = vmatpush1.msra.mxu0 0.0
      %741 = vmatprep.subr.mxu0 0.0
      %742 = vmatpush1.msra.mxu0 %v709
      %743 = vmatprep.subr.mxu0 0.0
      %744 = vmatpush2.msra.mxu0 0.0
      %745 = vmatprep.subr.mxu0 0.0
      %746 = vmatpush2.msra.mxu0 0.0
      %747 = vmatprep.subr.mxu0 0.0
      %748 = vmatpush2.msra.mxu0 0.0
      %749 = vmatprep.subr.mxu0 0.0
      %750 = vmatpush2.msra.mxu0 0.0
      %751 = vmatprep.subr.mxu0 0.0
      %752 = vmatpush2.msra.mxu0 0.0
      %753 = vmatprep.subr.mxu0 0.0
      %754 = vmatpush2.msra.mxu0 0.0
      %755 = vmatprep.subr.mxu0 0.0
      %756 = vmatpush2.msra.mxu0 0.0
      %757 = vmatprep.subr.mxu0 0.0
      %758 = vmatpush2.msra.mxu0 0.0
      %759 = vmatprep.subr.mxu0 0.0
      %760 = vmatpush2.msra.mxu0 0.0
      %761 = vmatprep.subr.mxu0 0.0
      %762 = vmatpush2.msra.mxu0 0.0
      %763 = vmatprep.subr.mxu0 0.0
      %764 = vmatpush2.msra.mxu0 0.0
      %765 = vmatprep.subr.mxu0 0.0
      %766 = vmatpush2.msra.mxu0 0.0
      %767 = vmatprep.subr.mxu0 0.0
      %768 = vmatpush2.msra.mxu0 0.0
      %769 = vmatprep.subr.mxu0 0.0
      %770 = vmatpush2.msra.mxu0 0.0
      %771 = vmatprep.subr.mxu0 0.0
      %772 = vmatpush2.msra.mxu0 0.0
      %773 = vmatprep.subr.mxu0 0.0
      %774 = vmatpush2.msra.mxu0 0.0
      %775 = vmatprep.mubr.f32.mxu0 0.0
      %776 = vmatmul.mubr.f32.gmra.mxu0 %v676
      %v777 = vpop.f32.mrf.mxu0
      %v778 = vadd.f32 %v598, %v777
      %v779 = vpop.f32.mrf.mxu0
      %780 = vmatprep.mubr.f32.mxu0 0.0
      %781 = vmatmul.mubr.f32.gmra.mxu0 %v678
      %v782 = vpop.f32.mrf.mxu0
      %v783 = vadd.f32 %v603, %v782
      %v784 = vpop.f32.mrf.mxu0
      %785 = vmatprep.mubr.f32.mxu0 0.0
      %786 = vmatmul.mubr.f32.gmra.mxu0 %v680
      %v787 = vpop.f32.mrf.mxu0
      %v788 = vadd.f32 %v608, %v787
      %v789 = vpop.f32.mrf.mxu0
      %790 = vmatprep.mubr.f32.mxu0 0.0
      %791 = vmatmul.mubr.f32.gmra.mxu0 %v682
      %v792 = vpop.f32.mrf.mxu0
      %v793 = vadd.f32 %v613, %v792
      %v794 = vpop.f32.mrf.mxu0
      %795 = vmatprep.mubr.f32.mxu0 0.0
      %796 = vmatmul.mubr.f32.gmra.mxu0 %v684
      %v797 = vpop.f32.mrf.mxu0
      %v798 = vadd.f32 %v618, %v797
      %v799 = vpop.f32.mrf.mxu0
      %800 = vmatprep.mubr.f32.mxu0 0.0
      %801 = vmatmul.mubr.f32.gmra.mxu0 %v686
      %v802 = vpop.f32.mrf.mxu0
      %v803 = vadd.f32 %v623, %v802
      %v804 = vpop.f32.mrf.mxu0
      %805 = vmatprep.mubr.f32.mxu0 0.0
      %806 = vmatmul.mubr.f32.gmra.mxu0 %v688
      %v807 = vpop.f32.mrf.mxu0
      %v808 = vadd.f32 %v628, %v807
      %v809 = vpop.f32.mrf.mxu0
      %810 = vmatprep.mubr.f32.mxu0 0.0
      %811 = vmatmul.mubr.f32.gmra.mxu0 %v690
      %v812 = vpop.f32.mrf.mxu0
      %v813 = vadd.f32 %v633, %v812
      %v814 = vpop.f32.mrf.mxu0
      %815 = vmatprep.mubr.f32.mxu0 0.0
      %816 = vmatmul.mubr.f32.gmra.mxu0 %v692
      %v817 = vpop.f32.mrf.mxu0
      %v818 = vadd.f32 %v638, %v817
      %v819 = vpop.f32.mrf.mxu0
      %820 = vmatprep.mubr.f32.mxu0 0.0
      %821 = vmatmul.mubr.f32.gmra.mxu0 %v694
      %v822 = vpop.f32.mrf.mxu0
      %v823 = vadd.f32 %v643, %v822
      %v824 = vpop.f32.mrf.mxu0
      %825 = vmatprep.mubr.f32.mxu0 0.0
      %826 = vmatmul.mubr.f32.gmra.mxu0 %v696
      %v827 = vpop.f32.mrf.mxu0
      %v828 = vadd.f32 %v648, %v827
      %v829 = vpop.f32.mrf.mxu0
      %830 = vmatprep.mubr.f32.mxu0 0.0
      %831 = vmatmul.mubr.f32.gmra.mxu0 %v698
      %v832 = vpop.f32.mrf.mxu0
      %v833 = vadd.f32 %v653, %v832
      %v834 = vpop.f32.mrf.mxu0
      %835 = vmatprep.mubr.f32.mxu0 0.0
      %836 = vmatmul.mubr.f32.gmra.mxu0 %v700
      %v837 = vpop.f32.mrf.mxu0
      %v838 = vadd.f32 %v658, %v837
      %v839 = vpop.f32.mrf.mxu0
      %840 = vmatprep.mubr.f32.mxu0 0.0
      %841 = vmatmul.mubr.f32.gmra.mxu0 %v702
      %v842 = vpop.f32.mrf.mxu0
      %v843 = vadd.f32 %v663, %v842
      %v844 = vpop.f32.mrf.mxu0
      %845 = vmatprep.mubr.f32.mxu0 0.0
      %846 = vmatmul.mubr.f32.gmra.mxu0 %v704
      %v847 = vpop.f32.mrf.mxu0
      %v848 = vadd.f32 %v668, %v847
      %v849 = vpop.f32.mrf.mxu0
      %850 = vmatprep.mubr.f32.mxu0 0.0
      %851 = vmatmul.mubr.f32.gmra.mxu0 %v706
      %v852 = vpop.f32.mrf.mxu0
      %v853 = vadd.f32 %v673, %v852
      %v854 = vpop.f32.mrf.mxu0
      %855 = vdwg.mxu0
      %s856 = scalar_lea.vmem %s2, 8
      %v857 = vld [vmem:[%s856] sm:$0xf]
      %v858 = vsel %vm494, %v338, 0
      %v860 = vsel %vm494, %v339, 0
      %v862 = vsel %vm494, %v341, 0
      %v864 = vsel %vm494, %v342, 0
      %v866 = vsel %vm494, %v344, 0
      %v868 = vsel %vm494, %v345, 0
      %v870 = vsel %vm494, %v347, 0
      %v872 = vsel %vm494, %v348, 0
      %v874 = vsel %vm494, %v350, 0
      %v876 = vsel %vm494, %v351, 0
      %v878 = vsel %vm494, %v353, 0
      %v880 = vsel %vm494, %v354, 0
      %v882 = vsel %vm494, %v356, 0
      %v884 = vsel %vm494, %v357, 0
      %v886 = vsel %vm494, %v359, 0
      %v888 = vsel %vm494, %v360, 0
      %v891 = vsel %vm527, %v857, 0
      %893 = vmatprep.subr.mxu0 0.0
      %894 = vmatpush1.msra.mxu0 0.0
      %895 = vmatprep.subr.mxu0 0.0
      %896 = vmatpush1.msra.mxu0 0.0
      %897 = vmatprep.subr.mxu0 0.0
      %898 = vmatpush1.msra.mxu0 0.0
      %899 = vmatprep.subr.mxu0 0.0
      %900 = vmatpush1.msra.mxu0 0.0
      %901 = vmatprep.subr.mxu0 0.0
      %902 = vmatpush1.msra.mxu0 0.0
      %903 = vmatprep.subr.mxu0 0.0
      %904 = vmatpush1.msra.mxu0 0.0
      %905 = vmatprep.subr.mxu0 0.0
      %906 = vmatpush1.msra.mxu0 0.0
      %907 = vmatprep.subr.mxu0 0.0
      %908 = vmatpush1.msra.mxu0 0.0
      %909 = vmatprep.subr.mxu0 0.0
      %910 = vmatpush1.msra.mxu0 0.0
      %911 = vmatprep.subr.mxu0 0.0
      %912 = vmatpush1.msra.mxu0 0.0
      %913 = vmatprep.subr.mxu0 0.0
      %914 = vmatpush1.msra.mxu0 0.0
      %915 = vmatprep.subr.mxu0 0.0
      %916 = vmatpush1.msra.mxu0 0.0
      %917 = vmatprep.subr.mxu0 0.0
      %918 = vmatpush1.msra.mxu0 0.0
      %919 = vmatprep.subr.mxu0 0.0
      %920 = vmatpush1.msra.mxu0 0.0
      %921 = vmatprep.subr.mxu0 0.0
      %922 = vmatpush1.msra.mxu0 0.0
      %923 = vmatprep.subr.mxu0 0.0
      %924 = vmatpush1.msra.mxu0 %v891
      %925 = vmatprep.subr.mxu0 0.0
      %926 = vmatpush2.msra.mxu0 0.0
      %927 = vmatprep.subr.mxu0 0.0
      %928 = vmatpush2.msra.mxu0 0.0
      %929 = vmatprep.subr.mxu0 0.0
      %930 = vmatpush2.msra.mxu0 0.0
      %931 = vmatprep.subr.mxu0 0.0
      %932 = vmatpush2.msra.mxu0 0.0
      %933 = vmatprep.subr.mxu0 0.0
      %934 = vmatpush2.msra.mxu0 0.0
      %935 = vmatprep.subr.mxu0 0.0
      %936 = vmatpush2.msra.mxu0 0.0
      %937 = vmatprep.subr.mxu0 0.0
      %938 = vmatpush2.msra.mxu0 0.0
      %939 = vmatprep.subr.mxu0 0.0
      %940 = vmatpush2.msra.mxu0 0.0
      %941 = vmatprep.subr.mxu0 0.0
      %942 = vmatpush2.msra.mxu0 0.0
      %943 = vmatprep.subr.mxu0 0.0
      %944 = vmatpush2.msra.mxu0 0.0
      %945 = vmatprep.subr.mxu0 0.0
      %946 = vmatpush2.msra.mxu0 0.0
      %947 = vmatprep.subr.mxu0 0.0
      %948 = vmatpush2.msra.mxu0 0.0
      %949 = vmatprep.subr.mxu0 0.0
      %950 = vmatpush2.msra.mxu0 0.0
      %951 = vmatprep.subr.mxu0 0.0
      %952 = vmatpush2.msra.mxu0 0.0
      %953 = vmatprep.subr.mxu0 0.0
      %954 = vmatpush2.msra.mxu0 0.0
      %955 = vmatprep.subr.mxu0 0.0
      %956 = vmatpush2.msra.mxu0 0.0
      %957 = vmatprep.mubr.f32.mxu0 0.0
      %958 = vmatmul.mubr.f32.gmra.mxu0 %v858
      %v959 = vpop.f32.mrf.mxu0
      %v960 = vadd.f32 0.0, %v959
      %v961 = vpop.f32.mrf.mxu0
      %962 = vmatprep.mubr.f32.mxu0 0.0
      %963 = vmatmul.mubr.f32.gmra.mxu0 %v860
      %v964 = vpop.f32.mrf.mxu0
      %v965 = vadd.f32 0.0, %v964
      %v966 = vpop.f32.mrf.mxu0
      %967 = vmatprep.mubr.f32.mxu0 0.0
      %968 = vmatmul.mubr.f32.gmra.mxu0 %v862
      %v969 = vpop.f32.mrf.mxu0
      %v970 = vadd.f32 0.0, %v969
      %v971 = vpop.f32.mrf.mxu0
      %972 = vmatprep.mubr.f32.mxu0 0.0
      %973 = vmatmul.mubr.f32.gmra.mxu0 %v864
      %v974 = vpop.f32.mrf.mxu0
      %v975 = vadd.f32 0.0, %v974
      %v976 = vpop.f32.mrf.mxu0
      %977 = vmatprep.mubr.f32.mxu0 0.0
      %978 = vmatmul.mubr.f32.gmra.mxu0 %v866
      %v979 = vpop.f32.mrf.mxu0
      %v980 = vadd.f32 0.0, %v979
      %v981 = vpop.f32.mrf.mxu0
      %982 = vmatprep.mubr.f32.mxu0 0.0
      %983 = vmatmul.mubr.f32.gmra.mxu0 %v868
      %v984 = vpop.f32.mrf.mxu0
      %v985 = vadd.f32 0.0, %v984
      %v986 = vpop.f32.mrf.mxu0
      %987 = vmatprep.mubr.f32.mxu0 0.0
      %988 = vmatmul.mubr.f32.gmra.mxu0 %v870
      %v989 = vpop.f32.mrf.mxu0
      %v990 = vadd.f32 0.0, %v989
      %v991 = vpop.f32.mrf.mxu0
      %992 = vmatprep.mubr.f32.mxu0 0.0
      %993 = vmatmul.mubr.f32.gmra.mxu0 %v872
      %v994 = vpop.f32.mrf.mxu0
      %v995 = vadd.f32 0.0, %v994
      %v996 = vpop.f32.mrf.mxu0
      %997 = vmatprep.mubr.f32.mxu0 0.0
      %998 = vmatmul.mubr.f32.gmra.mxu0 %v874
      %v999 = vpop.f32.mrf.mxu0
      %v1000 = vadd.f32 0.0, %v999
      %v1001 = vpop.f32.mrf.mxu0
      %1002 = vmatprep.mubr.f32.mxu0 0.0
      %1003 = vmatmul.mubr.f32.gmra.mxu0 %v876
      %v1004 = vpop.f32.mrf.mxu0
      %v1005 = vadd.f32 0.0, %v1004
      %v1006 = vpop.f32.mrf.mxu0
      %1007 = vmatprep.mubr.f32.mxu0 0.0
      %1008 = vmatmul.mubr.f32.gmra.mxu0 %v878
      %v1009 = vpop.f32.mrf.mxu0
      %v1010 = vadd.f32 0.0, %v1009
      %v1011 = vpop.f32.mrf.mxu0
      %1012 = vmatprep.mubr.f32.mxu0 0.0
      %1013 = vmatmul.mubr.f32.gmra.mxu0 %v880
      %v1014 = vpop.f32.mrf.mxu0
      %v1015 = vadd.f32 0.0, %v1014
      %v1016 = vpop.f32.mrf.mxu0
      %1017 = vmatprep.mubr.f32.mxu0 0.0
      %1018 = vmatmul.mubr.f32.gmra.mxu0 %v882
      %v1019 = vpop.f32.mrf.mxu0
      %v1020 = vadd.f32 0.0, %v1019
      %v1021 = vpop.f32.mrf.mxu0
      %1022 = vmatprep.mubr.f32.mxu0 0.0
      %1023 = vmatmul.mubr.f32.gmra.mxu0 %v884
      %v1024 = vpop.f32.mrf.mxu0
      %v1025 = vadd.f32 0.0, %v1024
      %v1026 = vpop.f32.mrf.mxu0
      %1027 = vmatprep.mubr.f32.mxu0 0.0
      %1028 = vmatmul.mubr.f32.gmra.mxu0 %v886
      %v1029 = vpop.f32.mrf.mxu0
      %v1030 = vadd.f32 0.0, %v1029
      %v1031 = vpop.f32.mrf.mxu0
      %1032 = vmatprep.mubr.f32.mxu0 0.0
      %1033 = vmatmul.mubr.f32.gmra.mxu0 %v888
      %v1034 = vpop.f32.mrf.mxu0
      %v1035 = vadd.f32 0.0, %v1034
      %v1036 = vpop.f32.mrf.mxu0
      %1037 = vdwg.mxu0
      %v1038 = vadd.f32 %v778, %v960
      %v1039 = vadd.f32 %v783, %v965
      %v1040 = vadd.f32 %v788, %v970
      %v1041 = vadd.f32 %v793, %v975
      %v1042 = vadd.f32 %v798, %v980
      %v1043 = vadd.f32 %v803, %v985
      %v1044 = vadd.f32 %v808, %v990
      %v1045 = vadd.f32 %v813, %v995
      %v1046 = vadd.f32 %v818, %v1000
      %v1047 = vadd.f32 %v823, %v1005
      %v1048 = vadd.f32 %v828, %v1010
      %v1049 = vadd.f32 %v833, %v1015
      %v1050 = vadd.f32 %v838, %v1020
      %v1051 = vadd.f32 %v843, %v1025
      %v1052 = vadd.f32 %v848, %v1030
      %v1053 = vadd.f32 %v853, %v1035
      %s1054 = scalar_lea.vmem %s2, 12
      %v1055 = vld [vmem:[%s1054] sm:$0xf]
      %v1056 = vsel %vm494, %v453, 0
      %v1058 = vsel %vm494, %v455, 0
      %v1060 = vsel %vm494, %v458, 0
      %v1062 = vsel %vm494, %v460, 0
      %v1064 = vsel %vm494, %v463, 0
      %v1066 = vsel %vm494, %v465, 0
      %v1068 = vsel %vm494, %v468, 0
      %v1070 = vsel %vm494, %v470, 0
      %v1072 = vsel %vm494, %v473, 0
      %v1074 = vsel %vm494, %v475, 0
      %v1076 = vsel %vm494, %v478, 0
      %v1078 = vsel %vm494, %v480, 0
      %v1080 = vsel %vm494, %v483, 0
      %v1082 = vsel %vm494, %v485, 0
      %v1084 = vsel %vm494, %v488, 0
      %v1086 = vsel %vm494, %v490, 0
      %v1089 = vsel %vm527, %v1055, 0
      %1091 = vmatprep.subr.mxu0 0.0
      %1092 = vmatpush1.msra.mxu0 0.0
      %1093 = vmatprep.subr.mxu0 0.0
      %1094 = vmatpush1.msra.mxu0 0.0
      %1095 = vmatprep.subr.mxu0 0.0
      %1096 = vmatpush1.msra.mxu0 0.0
      %1097 = vmatprep.subr.mxu0 0.0
      %1098 = vmatpush1.msra.mxu0 0.0
      %1099 = vmatprep.subr.mxu0 0.0
      %1100 = vmatpush1.msra.mxu0 0.0
      %1101 = vmatprep.subr.mxu0 0.0
      %1102 = vmatpush1.msra.mxu0 0.0
      %1103 = vmatprep.subr.mxu0 0.0
      %1104 = vmatpush1.msra.mxu0 0.0
      %1105 = vmatprep.subr.mxu0 0.0
      %1106 = vmatpush1.msra.mxu0 0.0
      %1107 = vmatprep.subr.mxu0 0.0
      %1108 = vmatpush1.msra.mxu0 0.0
      %1109 = vmatprep.subr.mxu0 0.0
      %1110 = vmatpush1.msra.mxu0 0.0
      %1111 = vmatprep.subr.mxu0 0.0
      %1112 = vmatpush1.msra.mxu0 0.0
      %1113 = vmatprep.subr.mxu0 0.0
      %1114 = vmatpush1.msra.mxu0 0.0
      %1115 = vmatprep.subr.mxu0 0.0
      %1116 = vmatpush1.msra.mxu0 0.0
      %1117 = vmatprep.subr.mxu0 0.0
      %1118 = vmatpush1.msra.mxu0 0.0
      %1119 = vmatprep.subr.mxu0 0.0
      %1120 = vmatpush1.msra.mxu0 0.0
      %1121 = vmatprep.subr.mxu0 0.0
      %1122 = vmatpush1.msra.mxu0 %v1089
      %1123 = vmatprep.subr.mxu0 0.0
      %1124 = vmatpush2.msra.mxu0 0.0
      %1125 = vmatprep.subr.mxu0 0.0
      %1126 = vmatpush2.msra.mxu0 0.0
      %1127 = vmatprep.subr.mxu0 0.0
      %1128 = vmatpush2.msra.mxu0 0.0
      %1129 = vmatprep.subr.mxu0 0.0
      %1130 = vmatpush2.msra.mxu0 0.0
      %1131 = vmatprep.subr.mxu0 0.0
      %1132 = vmatpush2.msra.mxu0 0.0
      %1133 = vmatprep.subr.mxu0 0.0
      %1134 = vmatpush2.msra.mxu0 0.0
      %1135 = vmatprep.subr.mxu0 0.0
      %1136 = vmatpush2.msra.mxu0 0.0
      %1137 = vmatprep.subr.mxu0 0.0
      %1138 = vmatpush2.msra.mxu0 0.0
      %1139 = vmatprep.subr.mxu0 0.0
      %1140 = vmatpush2.msra.mxu0 0.0
      %1141 = vmatprep.subr.mxu0 0.0
      %1142 = vmatpush2.msra.mxu0 0.0
      %1143 = vmatprep.subr.mxu0 0.0
      %1144 = vmatpush2.msra.mxu0 0.0
      %1145 = vmatprep.subr.mxu0 0.0
      %1146 = vmatpush2.msra.mxu0 0.0
      %1147 = vmatprep.subr.mxu0 0.0
      %1148 = vmatpush2.msra.mxu0 0.0
      %1149 = vmatprep.subr.mxu0 0.0
      %1150 = vmatpush2.msra.mxu0 0.0
      %1151 = vmatprep.subr.mxu0 0.0
      %1152 = vmatpush2.msra.mxu0 0.0
      %1153 = vmatprep.subr.mxu0 0.0
      %1154 = vmatpush2.msra.mxu0 0.0
      %1155 = vmatprep.mubr.f32.mxu0 0.0
      %1156 = vmatmul.mubr.f32.gmra.mxu0 %v1056
      %v1157 = vpop.f32.mrf.mxu0
      %v1158 = vadd.f32 0.0, %v1157
      %v1159 = vpop.f32.mrf.mxu0
      %1160 = vmatprep.mubr.f32.mxu0 0.0
      %1161 = vmatmul.mubr.f32.gmra.mxu0 %v1058
      %v1162 = vpop.f32.mrf.mxu0
      %v1163 = vadd.f32 0.0, %v1162
      %v1164 = vpop.f32.mrf.mxu0
      %1165 = vmatprep.mubr.f32.mxu0 0.0
      %1166 = vmatmul.mubr.f32.gmra.mxu0 %v1060
      %v1167 = vpop.f32.mrf.mxu0
      %v1168 = vadd.f32 0.0, %v1167
      %v1169 = vpop.f32.mrf.mxu0
      %1170 = vmatprep.mubr.f32.mxu0 0.0
      %1171 = vmatmul.mubr.f32.gmra.mxu0 %v1062
      %v1172 = vpop.f32.mrf.mxu0
      %v1173 = vadd.f32 0.0, %v1172
      %v1174 = vpop.f32.mrf.mxu0
      %1175 = vmatprep.mubr.f32.mxu0 0.0
      %1176 = vmatmul.mubr.f32.gmra.mxu0 %v1064
      %v1177 = vpop.f32.mrf.mxu0
      %v1178 = vadd.f32 0.0, %v1177
      %v1179 = vpop.f32.mrf.mxu0
      %1180 = vmatprep.mubr.f32.mxu0 0.0
      %1181 = vmatmul.mubr.f32.gmra.mxu0 %v1066
      %v1182 = vpop.f32.mrf.mxu0
      %v1183 = vadd.f32 0.0, %v1182
      %v1184 = vpop.f32.mrf.mxu0
      %1185 = vmatprep.mubr.f32.mxu0 0.0
      %1186 = vmatmul.mubr.f32.gmra.mxu0 %v1068
      %v1187 = vpop.f32.mrf.mxu0
      %v1188 = vadd.f32 0.0, %v1187
      %v1189 = vpop.f32.mrf.mxu0
      %1190 = vmatprep.mubr.f32.mxu0 0.0
      %1191 = vmatmul.mubr.f32.gmra.mxu0 %v1070
      %v1192 = vpop.f32.mrf.mxu0
      %v1193 = vadd.f32 0.0, %v1192
      %v1194 = vpop.f32.mrf.mxu0
      %1195 = vmatprep.mubr.f32.mxu0 0.0
      %1196 = vmatmul.mubr.f32.gmra.mxu0 %v1072
      %v1197 = vpop.f32.mrf.mxu0
      %v1198 = vadd.f32 0.0, %v1197
      %v1199 = vpop.f32.mrf.mxu0
      %1200 = vmatprep.mubr.f32.mxu0 0.0
      %1201 = vmatmul.mubr.f32.gmra.mxu0 %v1074
      %v1202 = vpop.f32.mrf.mxu0
      %v1203 = vadd.f32 0.0, %v1202
      %v1204 = vpop.f32.mrf.mxu0
      %1205 = vmatprep.mubr.f32.mxu0 0.0
      %1206 = vmatmul.mubr.f32.gmra.mxu0 %v1076
      %v1207 = vpop.f32.mrf.mxu0
      %v1208 = vadd.f32 0.0, %v1207
      %v1209 = vpop.f32.mrf.mxu0
      %1210 = vmatprep.mubr.f32.mxu0 0.0
      %1211 = vmatmul.mubr.f32.gmra.mxu0 %v1078
      %v1212 = vpop.f32.mrf.mxu0
      %v1213 = vadd.f32 0.0, %v1212
      %v1214 = vpop.f32.mrf.mxu0
      %1215 = vmatprep.mubr.f32.mxu0 0.0
      %1216 = vmatmul.mubr.f32.gmra.mxu0 %v1080
      %v1217 = vpop.f32.mrf.mxu0
      %v1218 = vadd.f32 0.0, %v1217
      %v1219 = vpop.f32.mrf.mxu0
      %1220 = vmatprep.mubr.f32.mxu0 0.0
      %1221 = vmatmul.mubr.f32.gmra.mxu0 %v1082
      %v1222 = vpop.f32.mrf.mxu0
      %v1223 = vadd.f32 0.0, %v1222
      %v1224 = vpop.f32.mrf.mxu0
      %1225 = vmatprep.mubr.f32.mxu0 0.0
      %1226 = vmatmul.mubr.f32.gmra.mxu0 %v1084
      %v1227 = vpop.f32.mrf.mxu0
      %v1228 = vadd.f32 0.0, %v1227
      %v1229 = vpop.f32.mrf.mxu0
      %1230 = vmatprep.mubr.f32.mxu0 0.0
      %1231 = vmatmul.mubr.f32.gmra.mxu0 %v1086
      %v1232 = vpop.f32.mrf.mxu0
      %v1233 = vadd.f32 0.0, %v1232
      %v1234 = vpop.f32.mrf.mxu0
      %1235 = vdwg.mxu0
      %v1236 = vadd.f32 %v1038, %v1158
      %v1237 = vadd.f32 %v1039, %v1163
      %v1238 = vadd.f32 %v1040, %v1168
      %v1239 = vadd.f32 %v1041, %v1173
      %v1240 = vadd.f32 %v1042, %v1178
      %v1241 = vadd.f32 %v1043, %v1183
      %v1242 = vadd.f32 %v1044, %v1188
      %v1243 = vadd.f32 %v1045, %v1193
      %v1244 = vadd.f32 %v1046, %v1198
      %v1245 = vadd.f32 %v1047, %v1203
      %v1246 = vadd.f32 %v1048, %v1208
      %v1247 = vadd.f32 %v1049, %v1213
      %v1248 = vadd.f32 %v1050, %v1218
      %v1249 = vadd.f32 %v1051, %v1223
      %v1250 = vadd.f32 %v1052, %v1228
      %v1251 = vadd.f32 %v1053, %v1233
      %v1252 = vld [vmem:[%s3] sm:$0x1]
      %v1254 = vlaneseq
      %v1255 = vshrl.u32 %v1254, 7
      %v1256 = vsub.s32 0, %v1255
      %v1257 = vrot.slane %v1252, %v1256
      %v1259 = vadd.f32 %v1236, %v1257
      %v1260 = vadd.f32 %v1237, %v1257
      %v1261 = vadd.f32 %v1238, %v1257
      %v1262 = vadd.f32 %v1239, %v1257
      %v1263 = vadd.f32 %v1240, %v1257
      %v1264 = vadd.f32 %v1241, %v1257
      %v1265 = vadd.f32 %v1242, %v1257
      %v1266 = vadd.f32 %v1243, %v1257
      %v1267 = vadd.f32 %v1244, %v1257
      %v1268 = vadd.f32 %v1245, %v1257
      %v1269 = vadd.f32 %v1246, %v1257
      %v1270 = vadd.f32 %v1247, %v1257
      %v1271 = vadd.f32 %v1248, %v1257
      %v1272 = vadd.f32 %v1249, %v1257
      %v1273 = vadd.f32 %v1250, %v1257
      %v1274 = vadd.f32 %v1251, %v1257
      %v1275 = vmax.f32 %v1259, 0.0
      %v1276 = vmax.f32 %v1260, 0.0
      %v1277 = vmax.f32 %v1261, 0.0
      %v1278 = vmax.f32 %v1262, 0.0
      %v1279 = vmax.f32 %v1263, 0.0
      %v1280 = vmax.f32 %v1264, 0.0
      %v1281 = vmax.f32 %v1265, 0.0
      %v1282 = vmax.f32 %v1266, 0.0
      %v1283 = vmax.f32 %v1267, 0.0
      %v1284 = vmax.f32 %v1268, 0.0
      %v1285 = vmax.f32 %v1269, 0.0
      %v1286 = vmax.f32 %v1270, 0.0
      %v1287 = vmax.f32 %v1271, 0.0
      %v1288 = vmax.f32 %v1272, 0.0
      %v1289 = vmax.f32 %v1273, 0.0
      %v1290 = vmax.f32 %v1274, 0.0
      %vm1291 = vcmask 261120
      %1292 = vst.msk [vmem:[%s311] sm:$0xff] %vm1291, %v1275
      %1293 = vst.msk [vmem:[%s311 + $0x8] sm:$0xff] %vm1291, %v1276
      %1294 = vst.msk [vmem:[%s311 + $0x10] sm:$0xff] %vm1291, %v1277
      %1295 = vst.msk [vmem:[%s311 + $0x18] sm:$0xff] %vm1291, %v1278
      %1296 = vst.msk [vmem:[%s311 + $0x20] sm:$0xff] %vm1291, %v1279
      %1297 = vst.msk [vmem:[%s311 + $0x28] sm:$0xff] %vm1291, %v1280
      %1298 = vst.msk [vmem:[%s311 + $0x30] sm:$0xff] %vm1291, %v1281
      %1299 = vst.msk [vmem:[%s311 + $0x38] sm:$0xff] %vm1291, %v1282
      %1300 = vst.msk [vmem:[%s311 + $0x40] sm:$0xff] %vm1291, %v1283
      %1301 = vst.msk [vmem:[%s311 + $0x48] sm:$0xff] %vm1291, %v1284
      %1302 = vst.msk [vmem:[%s311 + $0x50] sm:$0xff] %vm1291, %v1285
      %1303 = vst.msk [vmem:[%s311 + $0x58] sm:$0xff] %vm1291, %v1286
      %1304 = vst.msk [vmem:[%s311 + $0x60] sm:$0xff] %vm1291, %v1287
      %1305 = vst.msk [vmem:[%s311 + $0x68] sm:$0xff] %vm1291, %v1288
      %1306 = vst.msk [vmem:[%s311 + $0x70] sm:$0xff] %vm1291, %v1289
      %1307 = vst.msk [vmem:[%s311 + $0x78] sm:$0xff] %vm1291, %v1290
      %s1308 = smul.u32 16, %s20
      %p1309 = scmp.lt.s32.totalorder %s19, 1
      %s1310 = scalar_select %p1309, %s19, 1
      %p1311 = scmp.lt.s32.totalorder %s1308, 31
      %s1312 = scalar_select %p1311, %s1308, 31
      %s1313 = smul.addr %s1310, 32
      %s1314 = sadd.s32 %s1312, %s1313
      %s1315 = smul.addr %s1314, 8
      %s1316 = scalar_lea.vmem %s4, %s1315
      // Predicated region
      $region37: #{tpu_custom_call.1} parent=35 // pred_check
        %p1317 = pneg %p149
      $region38: #{tpu_custom_call.1} parent=35 // pred_check_branch
        %1319 = sbr.rel (%p1317) target = $region40
      $region39: #{tpu_custom_call.1} parent=35 // pred_region
        %s1320 = smul.u32 16, %s20
      $region40: #{tpu_custom_call.1} parent=35 // pred_fallthru
        _
    $region36: #{tpu_custom_call.1} parent=5 // pred_fallthru
      _
    %p1321 = scmp.le.s32.totalorder 2, %s10
    // Predicated region
    $region41: #{tpu_custom_call.1} parent=5 // pred_check
      %p1322 = pneg %p1321
    $region42: #{tpu_custom_call.1} parent=5 // pred_check_branch
      %1324 = sbr.rel (%p1322) target = $region44
    $region43: #{tpu_custom_call.1} parent=5 // pred_region
      %s1325 = ssub.s32 %s10, 2
      // Predicated region
      $region45: #{tpu_custom_call.1} parent=43 // pred_check
        %p1326 = pneg %p155
      $region46: #{tpu_custom_call.1} parent=43 // pred_check_branch
        %1328 = sbr.rel (%p1326) target = $region48
      $region47: #{tpu_custom_call.1} parent=43 // pred_region
        %s1329 = smul.u32 16, %s22
        %p1330 = scmp.lt.s32.totalorder %s21, 1
        %s1331 = scalar_select %p1330, %s21, 1
        %p1332 = scmp.lt.s32.totalorder %s1329, 31
        %s1333 = scalar_select %p1332, %s1329, 31
        %s1334 = smul.addr %s1331, 32
        %s1335 = sadd.s32 %s1333, %s1334
        %s1336 = smul.addr %s1335, 8
        %s1337 = scalar_lea.vmem %s4, %s1336
      $region48: #{tpu_custom_call.1} parent=43 // pred_fallthru
        _
    $region44: #{tpu_custom_call.1} parent=5 // pred_fallthru
      _
  $region6: #{tpu_custom_call.1} parent=0 // loop_footer
    %s14 = sadd.s32 1, %s10
  $region7: #{tpu_custom_call.1} parent=0 // loop_footer_branch
    %9 = sbr.rel target = $region3
  $region8: #{tpu_custom_call.1} parent=0 // loop_exit
    _

</llo_original>
